<compile_context>
chip_gen: v5e
topology: v5e:2x2
jax: 0.10.0
libtpu: 0.0.40
codegen_flags: <defaults>
</compile_context>

<pallas_src>
import jax
import jax.numpy as jnp
from jax.experimental import pallas as pl
from jax.experimental.pallas import tpu as pltpu


# Multiple of 8 (f32 sublanes) AND 16 (bf16 sublane packing).
_ROW_ALIGN = 16


def policy_kernel(gru_ref, gat_ref, wg_ref, wa_ref, b_ref, out_ref):
    # Two f32-accumulated MXU dots replace the fused dot over a pre-concatenated
    # activation: same math, no HBM concat.  MXU is nowhere near busy at
    # K=32/O=16, so the second dot is free.
    logits = (
        jnp.dot(gru_ref[...], wg_ref[...], preferred_element_type=jnp.float32)
        + jnp.dot(gat_ref[...], wa_ref[...], preferred_element_type=jnp.float32)
        + b_ref[...].astype(jnp.float32)
    )
    # Numerically stable row softmax over the feature (lane) axis.
    m = jnp.max(logits, axis=-1, keepdims=True)
    e = jnp.exp(logits - m)
    denom = jnp.sum(e, axis=-1, keepdims=True)
    r = pl.reciprocal(denom, approx=True)   # EUP vrcp: free slot, off the VALU
    r = r * (2.0 - denom * r)               # one Newton step -> ~f32-exact
    out_ref[...] = (e * r).astype(out_ref.dtype)


def prepare_policy_params(weight, bias, gru_hidden_dim, *, dtype=None):
    """One-time (parameter-load time) preprocessing — NOT in the per-step path.

    weight: [O, H_gru + H_gat] (PyTorch nn.Linear layout), bias: [O].
    Returns (w_gru [H_gru, O], w_gat [H_gat, O], bias2d [1, O]).
    Pass dtype=jnp.bfloat16 to run the matmuls in bf16 (f32 accumulation).
    """
    w = jnp.asarray(weight)
    if dtype is not None:
        w = w.astype(dtype)
    w_gru = w[:, :gru_hidden_dim].T          # [H_gru, O]
    w_gat = w[:, gru_hidden_dim:].T          # [H_gat, O]
    b2d = jnp.asarray(bias).reshape(1, -1).astype(jnp.float32)   # [1, O]
    return w_gru, w_gat, b2d


def _pick_batch_tile(batch, block_b):
    """Batch tile: big enough to amortize per-step overhead, aligned to 16
    rows, and (when the batch allows it) producing >=2 grid steps so the
    'parallel' grid axis can use both TensorCores on v7x."""
    if batch <= _ROW_ALIGN:
        return batch                          # tiny batch: one full-batch tile
    tb = min(min(block_b, batch), -(-batch // 2))   # <= ceil(B/2) -> >=2 steps
    tb = max(_ROW_ALIGN, (tb // _ROW_ALIGN) * _ROW_ALIGN)
    return tb


def policy_network_forward(gru_output, gat_output, w_gru, w_gat, b2d, *,
                           block_b=8192):
    """gru_output: [B, H_gru], gat_output: [B, H_gat] (f32 or bf16),
    w_gru/w_gat/b2d from prepare_policy_params.  Returns f32 [B, O]."""
    B, h_gru = gru_output.shape
    h_gat = gat_output.shape[1]
    out_dim = b2d.shape[-1]

    tb = _pick_batch_tile(B, block_b)
    grid = (pl.cdiv(B, tb),)

    act_bytes = jnp.dtype(gru_output.dtype).itemsize
    w_bytes = jnp.dtype(w_gru.dtype).itemsize

    vmem = pltpu.MemorySpace.VMEM
    return pl.pallas_call(
        policy_kernel,
        out_shape=jax.ShapeDtypeStruct((B, out_dim), jnp.float32),
        grid=grid,
        in_specs=[
            # activations: tiled over the batch (rows independent -> partial
            # trailing tile is masked on store and therefore safe)
            pl.BlockSpec((tb, h_gru), lambda i: (i, 0), memory_space=vmem),
            pl.BlockSpec((tb, h_gat), lambda i: (i, 0), memory_space=vmem),
            # weights + bias: same block every step -> stay VMEM-resident
            pl.BlockSpec((h_gru, out_dim), lambda i: (0, 0), memory_space=vmem),
            pl.BlockSpec((h_gat, out_dim), lambda i: (0, 0), memory_space=vmem),
            pl.BlockSpec((1, out_dim), lambda i: (0, 0), memory_space=vmem),
        ],
        out_specs=pl.BlockSpec((tb, out_dim), lambda i: (i, 0),
                               memory_space=vmem),
        compiler_params=pltpu.CompilerParams(
            # batch tiles are independent -> shard across TensorCores on v7x;
            # on single-TC v5e/v6e this is just a serial loop (harmless).
            dimension_semantics=("parallel",),
        ),
        cost_estimate=pl.CostEstimate(
            flops=2 * B * (h_gru + h_gat) * out_dim,
            transcendentals=B * out_dim + B,          # exp + reciprocal
            bytes_accessed=(act_bytes * B * (h_gru + h_gat)      # activations
                            + w_bytes * (h_gru + h_gat) * out_dim  # weights
                            + 4 * out_dim                          # bias
                            + 4 * B * out_dim),                    # output
        ),
    )(gru_output, gat_output, w_gru, w_gat, b2d)


if __name__ == "__main__":
    # Small, deterministic example shapes consistent with the module.
    B = 2
    GRU_HIDDEN_DIM = 32
    GAT_OUTPUT_DIM = 32
    OUTPUT_DIM = 16

    key = jax.random.PRNGKey(0)
    k_gru, k_gat, k_w, k_b = jax.random.split(key, 4)

    gru_output = jax.random.normal(k_gru, (B, GRU_HIDDEN_DIM), dtype=jnp.float32)
    gat_output = jax.random.normal(k_gat, (B, GAT_OUTPUT_DIM), dtype=jnp.float32)

    # nn.Linear(in_features, out_features): weight [O, In], bias [O],
    # init U(-1/sqrt(In), 1/sqrt(In)) — reproduced deterministically here.
    in_features = GRU_HIDDEN_DIM + GAT_OUTPUT_DIM
    bound = 1.0 / jnp.sqrt(jnp.float32(in_features))
    weight = jax.random.uniform(
        k_w, (OUTPUT_DIM, in_features), minval=-bound, maxval=bound,
        dtype=jnp.float32)
    bias = jax.random.uniform(
        k_b, (OUTPUT_DIM,), minval=-bound, maxval=bound, dtype=jnp.float32)

    # One-time parameter preprocessing (load time, not per-step).
    w_gru, w_gat, b2d = prepare_policy_params(weight, bias, GRU_HIDDEN_DIM)

    fwd = jax.jit(policy_network_forward)

    def reference(gru, gat):
        concat = jnp.concatenate([gru, gat], axis=1)
        return jax.nn.softmax(concat @ weight.T + bias, axis=1)

    # Tiny-batch path (single full-batch tile).
    out = jax.block_until_ready(fwd(gru_output, gat_output, w_gru, w_gat, b2d))
    ref = reference(gru_output, gat_output)
    assert out.shape == (B, OUTPUT_DIM)
    assert jnp.allclose(out, ref, atol=2e-5, rtol=2e-5)
    assert jnp.allclose(jnp.sum(out, axis=1), 1.0, atol=1e-5)

    # Multi-tile grid path (incl. a partial trailing batch tile), still small.
    B2 = 40
    k2a, k2b = jax.random.split(jax.random.PRNGKey(1))
    gru2 = jax.random.normal(k2a, (B2, GRU_HIDDEN_DIM), dtype=jnp.float32)
    gat2 = jax.random.normal(k2b, (B2, GAT_OUTPUT_DIM), dtype=jnp.float32)
    out2 = jax.block_until_ready(fwd(gru2, gat2, w_gru, w_gat, b2d))
    ref2 = reference(gru2, gat2)
    assert out2.shape == (B2, OUTPUT_DIM)
    assert jnp.allclose(out2, ref2, atol=2e-5, rtol=2e-5)
    assert jnp.allclose(jnp.sum(out2, axis=1), 1.0, atol=1e-5)

    print("KERNEL_OK")
</pallas_src>

<mosaic_0001>
module attributes {stable_mosaic.version = 11 : i64} {
  func.func @policy_kernel(%arg0: i32, %arg1: memref<2x32xf32, #tpu.memory_space<vmem>>, %arg2: memref<2x32xf32, #tpu.memory_space<vmem>>, %arg3: memref<32x16xf32, #tpu.memory_space<vmem>>, %arg4: memref<32x16xf32, #tpu.memory_space<vmem>>, %arg5: memref<1x16xf32, #tpu.memory_space<vmem>>, %arg6: memref<2x16xf32, #tpu.memory_space<vmem>>) attributes {dimension_semantics = [#tpu.dimension_semantics<parallel>], iteration_bounds = array<i64: 1>, scalar_prefetch = 0 : i64, scratch_operands = 0 : i64, tpu.core_type = #tpu.core_type<tc>, window_params = [{transform_indices = @transform_0, window_bounds = array<i64: 2, 32>}, {transform_indices = @transform_1, window_bounds = array<i64: 2, 32>}, {pipeline_mode = #tpu.pipeline_mode<synchronous>, transform_indices = @transform_2, window_bounds = array<i64: 32, 16>}, {pipeline_mode = #tpu.pipeline_mode<synchronous>, transform_indices = @transform_3, window_bounds = array<i64: 32, 16>}, {pipeline_mode = #tpu.pipeline_mode<synchronous>, transform_indices = @transform_4, window_bounds = array<i64: 1, 16>}, {transform_indices = @transform_5, window_bounds = array<i64: 2, 16>}]} {
    %c0 = arith.constant 0 : index
    %c0_0 = arith.constant 0 : index
    %0 = vector.load %arg1[%c0, %c0_0] : memref<2x32xf32, #tpu.memory_space<vmem>>, vector<2x32xf32>
    %c0_1 = arith.constant 0 : index
    %c0_2 = arith.constant 0 : index
    %1 = vector.load %arg3[%c0_1, %c0_2] : memref<32x16xf32, #tpu.memory_space<vmem>>, vector<32x16xf32>
    %cst = arith.constant dense<0.000000e+00> : vector<2x16xf32>
    %2 = tpu.matmul %0, %1, %cst {dimension_numbers = #tpu.dot_dimension_numbers<[1], [0], [0], [1], [0, 0, 1, 1], [], []>} : vector<2x32xf32>, vector<32x16xf32>, vector<2x16xf32> -> vector<2x16xf32>
    %c0_3 = arith.constant 0 : index
    %c0_4 = arith.constant 0 : index
    %3 = vector.load %arg2[%c0_3, %c0_4] : memref<2x32xf32, #tpu.memory_space<vmem>>, vector<2x32xf32>
    %c0_5 = arith.constant 0 : index
    %c0_6 = arith.constant 0 : index
    %4 = vector.load %arg4[%c0_5, %c0_6] : memref<32x16xf32, #tpu.memory_space<vmem>>, vector<32x16xf32>
    %cst_7 = arith.constant dense<0.000000e+00> : vector<2x16xf32>
    %5 = tpu.matmul %3, %4, %cst_7 {dimension_numbers = #tpu.dot_dimension_numbers<[1], [0], [0], [1], [0, 0, 1, 1], [], []>} : vector<2x32xf32>, vector<32x16xf32>, vector<2x16xf32> -> vector<2x16xf32>
    %6 = arith.addf %2, %5 : vector<2x16xf32>
    %c0_8 = arith.constant 0 : index
    %c0_9 = arith.constant 0 : index
    %7 = vector.load %arg5[%c0_8, %c0_9] : memref<1x16xf32, #tpu.memory_space<vmem>>, vector<1x16xf32>
    %8 = vector.broadcast %7 : vector<1x16xf32> to vector<2x16xf32>
    %9 = arith.addf %6, %8 : vector<2x16xf32>
    %cst_10 = arith.constant dense<0xFF800000> : vector<2xf32>
    %10 = vector.multi_reduction <maximumf>, %9, %cst_10 [1] : vector<2x16xf32> to vector<2xf32>
    %11 = vector.shape_cast %10 : vector<2xf32> to vector<2x1xf32>
    %12 = vector.broadcast %11 : vector<2x1xf32> to vector<2x16xf32>
    %13 = arith.subf %9, %12 : vector<2x16xf32>
    %14 = math.exp %13 : vector<2x16xf32>
    %cst_11 = arith.constant dense<0.000000e+00> : vector<2xf32>
    %15 = vector.multi_reduction <add>, %14, %cst_11 [1] : vector<2x16xf32> to vector<2xf32>
    %16 = vector.shape_cast %15 : vector<2xf32> to vector<2x1xf32>
    %17 = tpu.reciprocal %16 {approx = true} : vector<2x1xf32> -> vector<2x1xf32>
    %18 = arith.mulf %16, %17 : vector<2x1xf32>
    %cst_12 = arith.constant 2.000000e+00 : f32
    %19 = vector.broadcast %cst_12 : f32 to vector<2x1xf32>
    %20 = arith.subf %19, %18 : vector<2x1xf32>
    %21 = arith.mulf %17, %20 : vector<2x1xf32>
    %22 = vector.broadcast %21 : vector<2x1xf32> to vector<2x16xf32>
    %23 = arith.mulf %14, %22 : vector<2x16xf32>
    %c0_13 = arith.constant 0 : index
    %c0_14 = arith.constant 0 : index
    %24 = vector.load %arg6[%c0_13, %c0_14] : memref<2x16xf32, #tpu.memory_space<vmem>>, vector<2x16xf32>
    tpu.vector_store %arg6[%c0_13, %c0_14], %23 {strides = array<i32>} : memref<2x16xf32, #tpu.memory_space<vmem>>, vector<2x16xf32>,
    return
  }
  func.func @transform_0(%arg0: i32) -> (i32, i32) {
    %c0_i32 = arith.constant 0 : i32
    %c0_i32_0 = arith.constant 0 : i32
    return %arg0, %c0_i32 : i32, i32
  }
  func.func @transform_1(%arg0: i32) -> (i32, i32) {
    %c0_i32 = arith.constant 0 : i32
    %c0_i32_0 = arith.constant 0 : i32
    return %arg0, %c0_i32 : i32, i32
  }
  func.func @transform_2(%arg0: i32) -> (i32, i32) {
    %c0_i32 = arith.constant 0 : i32
    %c0_i32_0 = arith.constant 0 : i32
    %c0_i32_1 = arith.constant 0 : i32
    return %c0_i32, %c0_i32_0 : i32, i32
  }
  func.func @transform_3(%arg0: i32) -> (i32, i32) {
    %c0_i32 = arith.constant 0 : i32
    %c0_i32_0 = arith.constant 0 : i32
    %c0_i32_1 = arith.constant 0 : i32
    return %c0_i32, %c0_i32_0 : i32, i32
  }
  func.func @transform_4(%arg0: i32) -> (i32, i32) {
    %c0_i32 = arith.constant 0 : i32
    %c0_i32_0 = arith.constant 0 : i32
    %c0_i32_1 = arith.constant 0 : i32
    return %c0_i32, %c0_i32_0 : i32, i32
  }
  func.func @transform_5(%arg0: i32) -> (i32, i32) {
    %c0_i32 = arith.constant 0 : i32
    %c0_i32_0 = arith.constant 0 : i32
    return %arg0, %c0_i32 : i32, i32
  }
}

</mosaic_0001>

<llo_original>
// kernel: policy_network_forward.1
$region0: #{policy_network_forward.1}
  #allocation0 [shape = 'u32[]', space=smem, size = 0x4, offset = 0x4, fixed_abs, tag = 'smem constant byte address 0x4 - core index']
  #allocation1 [shape = 'u32[72,128]{1,0:T(1,128)}', space=vmem, size = 0x9000, scoped, tag = 'internal scratch']
  %s0 = inlined_call_operand.vmem [shape: f32[2,32], index: 0, kind: input, shape index: {}]
  %s1 = inlined_call_operand.vmem [shape: f32[2,32], index: 1, kind: input, shape index: {}]
  %s2 = inlined_call_operand.vmem [shape: f32[32,16], index: 2, kind: input, shape index: {}]
  %s3 = inlined_call_operand.vmem [shape: f32[32,16], index: 3, kind: input, shape index: {}]
  %s4 = inlined_call_operand.vmem [shape: f32[1,16], index: 4, kind: input, shape index: {}]
  %s5 = inlined_call_operand.hbm [shape: f32[2,16], index: 5, kind: output, shape index: {}]
  %s6 = sld [smem:[#allocation0]]
  $region30: #{policy_network_forward.1} parent=0
    _
  %s8 = ssub.s32 1, %s6
  %s9 = scalar_select 0, %s8, %s6
  $region1: #{policy_network_forward.1} parent=0
    #allocation2 [shape = 'u8[1024]{0}', space=vmem, size = 0x400, scoped, tag = 'output window, operand 0, single buffered']
    #allocation3 [shape = 's32[1]{0}', space=sflag, size = 0x4, scoped, tag = 'scoped memory for policy_network_forward.1']
    %10 = vsyncpa [#allocation3], 0
    // Predicated region
    $region2: #{policy_network_forward.1} parent=1 // pred_check
      _
    $region3: #{policy_network_forward.1} parent=1 // pred_check_branch
      %12 = sbr.rel (0) target = $region5
    $region4: #{policy_network_forward.1} parent=1 // pred_region
      _
    $region5: #{policy_network_forward.1} parent=1 // pred_fallthru
      _
    // Predicated region
    $region6: #{policy_network_forward.1} parent=1 // pred_check
      _
    $region7: #{policy_network_forward.1} parent=1 // pred_check_branch
      %14 = sbr.rel (0) target = $region9
    $region8: #{policy_network_forward.1} parent=1 // pred_region
      _
    $region9: #{policy_network_forward.1} parent=1 // pred_fallthru
      _
    // Predicated region
    $region10: #{policy_network_forward.1} parent=1 // pred_check
      _
    $region11: #{policy_network_forward.1} parent=1 // pred_check_branch
      %16 = sbr.rel (0) target = $region13
    $region12: #{policy_network_forward.1} parent=1 // pred_region
      _
    $region13: #{policy_network_forward.1} parent=1 // pred_fallthru
      _
    // Predicated region
    $region14: #{policy_network_forward.1} parent=1 // pred_check
      _
    $region15: #{policy_network_forward.1} parent=1 // pred_check_branch
      %18 = sbr.rel (0) target = $region17
    $region16: #{policy_network_forward.1} parent=1 // pred_region
      _
    $region17: #{policy_network_forward.1} parent=1 // pred_fallthru
      _
    // Predicated region
    $region18: #{policy_network_forward.1} parent=1 // pred_check
      _
    $region19: #{policy_network_forward.1} parent=1 // pred_check_branch
      %20 = sbr.rel (0) target = $region21
    $region20: #{policy_network_forward.1} parent=1 // pred_region
      _
    $region21: #{policy_network_forward.1} parent=1 // pred_fallthru
      _
    %v21 = vld [vmem:[%s0] sm:$0x3]
    %v22 = vld [vmem:[%s2] sm:$0xff]
    %v23 = vld [vmem:[%s2 + $0x8] sm:$0xff]
    %v24 = vld [vmem:[%s2 + $0x10] sm:$0xff]
    %v25 = vld [vmem:[%s2 + $0x18] sm:$0xff]
    %v26 = vld [vmem:[%s1] sm:$0x3]
    %v27 = vld [vmem:[%s3] sm:$0xff]
    %v28 = vld [vmem:[%s3 + $0x8] sm:$0xff]
    %v29 = vld [vmem:[%s3 + $0x10] sm:$0xff]
    %v30 = vld [vmem:[%s3 + $0x18] sm:$0xff]
    %vm31 = vcmask 261120
    %v33 = vsel %vm31, %v26, 0
    %35 = vmatpush.msra.mxu0 0.0
    %36 = vmatpush.msra.mxu0 0.0
    %37 = vmatpush.msra.mxu0 0.0
    %38 = vmatpush.msra.mxu0 0.0
    %39 = vmatpush.msra.mxu0 0.0
    %40 = vmatpush.msra.mxu0 0.0
    %41 = vmatpush.msra.mxu0 0.0
    %42 = vmatpush.msra.mxu0 0.0
    %43 = vmatpush.msra.mxu0 0.0
    %44 = vmatpush.msra.mxu0 0.0
    %45 = vmatpush.msra.mxu0 0.0
    %46 = vmatpush.msra.mxu0 0.0
    %47 = vmatpush.msra.mxu0 %v30
    %48 = vmatpush.msra.mxu0 %v29
    %49 = vmatpush.msra.mxu0 %v28
    %50 = vmatpush.msra.mxu0 %v27
    %51 = vmatmul.f32.gmra.mxu0 %v33
    %v52 = vpop.f32.mrf.mxu0
    %v53 = vadd.f32 0.0, %v52
    %54 = vdwg.mxu0
    %v56 = vsel %vm31, %v21, 0
    %58 = vmatpush.msra.mxu0 0.0
    %59 = vmatpush.msra.mxu0 0.0
    %60 = vmatpush.msra.mxu0 0.0
    %61 = vmatpush.msra.mxu0 0.0
    %62 = vmatpush.msra.mxu0 0.0
    %63 = vmatpush.msra.mxu0 0.0
    %64 = vmatpush.msra.mxu0 0.0
    %65 = vmatpush.msra.mxu0 0.0
    %66 = vmatpush.msra.mxu0 0.0
    %67 = vmatpush.msra.mxu0 0.0
    %68 = vmatpush.msra.mxu0 0.0
    %69 = vmatpush.msra.mxu0 0.0
    %70 = vmatpush.msra.mxu0 %v25
    %71 = vmatpush.msra.mxu0 %v24
    %72 = vmatpush.msra.mxu0 %v23
    %73 = vmatpush.msra.mxu0 %v22
    %74 = vmatmul.f32.gmra.mxu0 %v56
    %v75 = vpop.f32.mrf.mxu0
    %v76 = vadd.f32 %v53, %v75
    %77 = vdwg.mxu0
    %v78 = vld [vmem:[%s4] sm:$0x1]
    %v80 = vperm.slane %v78, 0
    %v82 = vadd.f32 %v76, %v80
    %vm83 = vcmask 123904
    %v84 = vsel %vm83, %v82, -inf
    %85 = vmax.xlane.f32.xlu0 %v84
    %v86 = vpop.xlane.xlu0 %85
    %v87 = vsub.f32 %v82, %v86
    %v88 = vmul.f32 %v87, 1.442695
    %v89 = vpow.pop %v88
    %v90 = vsel %vm83, %v89, 0.0
    %91 = vadd.xlane.f32.xlu0 %v90
    %v92 = vpop.xlane.xlu0 %91
    %v93 = vrcp.pop %v92
    %v94 = vmul.f32 %v92, %v93
    %v95 = vsub.f32 2.0, %v94
    %v96 = vmul.f32 %v93, %v95
    %v97 = vmul.f32 %v89, %v96
    %98 = vst.msk [vmem:[#allocation2] sm:$0x3] %vm83, %v97
    // Predicated region
    $region22: #{policy_network_forward.1} parent=1 // pred_check
      _
    $region23: #{policy_network_forward.1} parent=1 // pred_check_branch
      %100 = sbr.rel (0) target = $region25
    $region24: #{policy_network_forward.1} parent=1 // pred_region
      %102 = vsyncadd [#allocation3], 0
      %s104 = sshll.u32 [#allocation2], 4
      %s105 = int_to_ptr.vmem [resolvable:$true] %s104
      %s106 = sshll.u32 %s5, 4
      %s107 = int_to_ptr.hbm [resolvable:$true] %s106
      %109 = dma.vmem_to_hbm [thread:$0]  %s105, 32, %s107, [#allocation3]
    $region25: #{policy_network_forward.1} parent=1 // pred_fallthru
      _
    // Predicated region
    $region26: #{policy_network_forward.1} parent=1 // pred_check
      _
    $region27: #{policy_network_forward.1} parent=1 // pred_check_branch
      %111 = sbr.rel (0) target = $region29
    $region28: #{policy_network_forward.1} parent=1 // pred_region
      %113 = dma.done [#allocation3], 32
    $region29: #{policy_network_forward.1} parent=1 // pred_fallthru
      _
    %114 = vsyncpa [#allocation3], 1

</llo_original>
